<compile_context>
chip_gen: v7x
topology: tpu7x:2x2x1
jax: 0.10.0
libtpu: 0.0.40
codegen_flags: <defaults>
</compile_context>

<pallas_src>
import math

import jax
import jax.numpy as jnp
from jax import lax
from jax.experimental import pallas as pl
from jax.experimental.pallas import tpu as pltpu


def _linear_bias_kernel(x_ref, w_ref, b_ref, o_ref):
    # x_ref: (TB, F), w_ref: (C, F) lane-dense, b_ref: (1, C) f32, o_ref: (TB, C)
    acc = lax.dot_general(
        x_ref[...], w_ref[...],
        dimension_numbers=(((1,), (1,)), ((), ())),   # contract F with F == x @ W.T
        preferred_element_type=jnp.float32)
    o_ref[...] = (acc + b_ref[...]).astype(o_ref.dtype)


def _linear_nobias_kernel(x_ref, w_ref, o_ref):
    acc = lax.dot_general(
        x_ref[...], w_ref[...],
        dimension_numbers=(((1,), (1,)), ((), ())),
        preferred_element_type=jnp.float32)
    o_ref[...] = acc.astype(o_ref.dtype)


def _round_up(v, m):
    return (v + m - 1) // m * m


def _choose_batch_tile(B, F, x_itemsize, block_b):
    """VMEM- and F-aware batch-tile (multiple of 8, <= block_b)."""
    # Budget for the x input pipeline (up to 3 buffers deep) — conservative
    # across v5e/v6e/v7x once vmem_limit_bytes is raised below.
    x_pipe_budget = 24 << 20
    tb_vmem = (x_pipe_budget // (3 * max(F, 1) * x_itemsize)) // 8 * 8
    tb_cap = max(8, min(block_b, tb_vmem))
    if B < 16:
        return B                      # single full block (block dim == array dim)
    # Guarantee >= 2 grid steps so the "parallel" axis can shard across v7x's
    # two TensorCores and DMA/compute overlap exists even for mid-size B.
    return min(tb_cap, _round_up(pl.cdiv(B, 2), 8))


def logistic_regression_forward(x, weight, bias=None, *, block_b=2048,
                                min_pallas_batch=128, force_pallas=False):
    """x: (B, C, H, W) or (B, F); weight: (num_classes, F) [native PyTorch layout];
    bias: (num_classes,) or None. Returns (B, num_classes) logits."""
    B = x.shape[0]
    x2d = x.reshape(B, -1)                       # torch.flatten(x, start_dim=1)
    F = x2d.shape[1]
    num_classes = weight.shape[0]
    assert weight.shape == (num_classes, F)
    out_dtype = jnp.result_type(x2d.dtype, weight.dtype)

    # Tiny batches: pallas_call launch/DMA-setup cost dominates; let XLA fuse.
    if B < min_pallas_batch and not force_pallas:
        out = jnp.dot(x2d, weight.T, preferred_element_type=jnp.float32)
        if bias is not None:
            out = out + bias.astype(jnp.float32)
        return out.astype(out_dtype)

    tb = _choose_batch_tile(B, F, x2d.dtype.itemsize, block_b)
    num_steps = pl.cdiv(B, tb)
    grid = (num_steps,)

    # Triple-buffer the x stream only when there are enough steps to overlap.
    if num_steps >= 3:
        x_spec = pl.BlockSpec((tb, F), lambda i: (i, 0),
                              pipeline_mode=pl.Buffered(3))
        n_xbuf = 3
    else:
        x_spec = pl.BlockSpec((tb, F), lambda i: (i, 0))
        n_xbuf = 2
    w_spec = pl.BlockSpec((num_classes, F), lambda i: (0, 0))       # VMEM-resident
    out_spec = pl.BlockSpec((tb, num_classes), lambda i: (i, 0))
    out_shape = jax.ShapeDtypeStruct((B, num_classes), out_dtype)

    # Rough VMEM footprint (lane/sublane padded) + headroom; raise the scoped
    # limit so v5e's 16 MiB default doesn't reject 8 MiB tiles, but stay well
    # under v7x's 64 MiB physical VMEM.
    f_pad = _round_up(F, 128)
    c_pad = _round_up(num_classes, 128)
    vmem_est = (n_xbuf * tb * f_pad * x2d.dtype.itemsize
                + 2 * tb * c_pad * jnp.dtype(out_dtype).itemsize
                + _round_up(num_classes, 8) * f_pad * weight.dtype.itemsize
                + 2 * c_pad * 4)
    vmem_limit = int(min(48 << 20, max(vmem_est + (8 << 20), 32 << 20)))

    cparams = pltpu.CompilerParams(
        dimension_semantics=("parallel",),
        vmem_limit_bytes=vmem_limit)
    cost = pl.CostEstimate(
        flops=2 * B * F * num_classes,
        transcendentals=0,
        bytes_accessed=(x2d.size * x2d.dtype.itemsize
                        + weight.size * weight.dtype.itemsize
                        + B * num_classes * jnp.dtype(out_dtype).itemsize))

    if bias is None:
        return pl.pallas_call(
            _linear_nobias_kernel,
            out_shape=out_shape,
            grid=grid,
            in_specs=[x_spec, w_spec],
            out_specs=out_spec,
            compiler_params=cparams,
            cost_estimate=cost,
        )(x2d, weight)

    b = bias.reshape(1, num_classes).astype(jnp.float32)            # f32 bias add
    b_spec = pl.BlockSpec((1, num_classes), lambda i: (0, 0))       # VMEM-resident
    return pl.pallas_call(
        _linear_bias_kernel,
        out_shape=out_shape,
        grid=grid,
        in_specs=[x_spec, w_spec, b_spec],
        out_specs=out_spec,
        compiler_params=cparams,
        cost_estimate=cost,
    )(x2d, weight, b)


if __name__ == "__main__":
    key = jax.random.PRNGKey(0)
    k_x, k_w, k_b, k_x2 = jax.random.split(key, 4)

    # Module-implied shapes: image-like input, flattened to num_features.
    B, C, H, W = 2, 4, 16, 16
    num_features = C * H * W          # 1024
    num_classes = 10

    x = jax.random.normal(k_x, (B, C, H, W), dtype=jnp.float32)
    # Deterministic init mimicking torch.nn.Linear: U(-1/sqrt(F), 1/sqrt(F)).
    bound = 1.0 / math.sqrt(num_features)
    weight = jax.random.uniform(
        k_w, (num_classes, num_features), minval=-bound, maxval=bound,
        dtype=jnp.float32)
    bias = jax.random.uniform(
        k_b, (num_classes,), minval=-bound, maxval=bound, dtype=jnp.float32)

    ref = x.reshape(B, -1) @ weight.T + bias

    # 1) Pallas kernel at the module's spec shapes (single full-batch block).
    logits = jax.block_until_ready(
        logistic_regression_forward(x, weight, bias, force_pallas=True))
    assert logits.shape == (B, num_classes)
    assert jnp.allclose(logits, ref, atol=2e-3, rtol=2e-3)

    # 2) Small-batch fast path (plain XLA fallback, default behavior at B=2).
    logits_fb = jax.block_until_ready(logistic_regression_forward(x, weight, bias))
    assert jnp.allclose(logits_fb, ref, atol=2e-3, rtol=2e-3)

    # 3) Larger batch exercising the multi-step tiled path with Buffered(3)
    #    (block_b=128 -> 4 "parallel" grid steps) and the no-bias kernel.
    Bb = 512
    xb = jax.random.normal(k_x2, (Bb, num_features), dtype=jnp.float32)
    ref_b = xb @ weight.T
    logits_b = jax.block_until_ready(
        logistic_regression_forward(xb, weight, None, block_b=128))
    assert logits_b.shape == (Bb, num_classes)
    assert jnp.allclose(logits_b, ref_b, atol=2e-3, rtol=2e-3)

    print("KERNEL_OK")
</pallas_src>

<mosaic_0001>
module attributes {stable_mosaic.version = 11 : i64} {
  func.func @_linear_bias_kernel(%arg0: i32, %arg1: memref<2x1024xf32, #tpu.memory_space<vmem>>, %arg2: memref<10x1024xf32, #tpu.memory_space<vmem>>, %arg3: memref<1x10xf32, #tpu.memory_space<vmem>>, %arg4: memref<2x10xf32, #tpu.memory_space<vmem>>) attributes {dimension_semantics = [#tpu.dimension_semantics<parallel>], iteration_bounds = array<i64: 1>, scalar_prefetch = 0 : i64, scratch_operands = 0 : i64, tpu.core_type = #tpu.core_type<tc>, window_params = [{transform_indices = @transform_0, window_bounds = array<i64: 2, 1024>}, {pipeline_mode = #tpu.pipeline_mode<synchronous>, transform_indices = @transform_1, window_bounds = array<i64: 10, 1024>}, {pipeline_mode = #tpu.pipeline_mode<synchronous>, transform_indices = @transform_2, window_bounds = array<i64: 1, 10>}, {transform_indices = @transform_3, window_bounds = array<i64: 2, 10>}]} {
    %c0 = arith.constant 0 : index
    %c0_0 = arith.constant 0 : index
    %0 = vector.load %arg1[%c0, %c0_0] : memref<2x1024xf32, #tpu.memory_space<vmem>>, vector<2x1024xf32>
    %c0_1 = arith.constant 0 : index
    %c0_2 = arith.constant 0 : index
    %1 = vector.load %arg2[%c0_1, %c0_2] : memref<10x1024xf32, #tpu.memory_space<vmem>>, vector<10x1024xf32>
    %cst = arith.constant dense<0.000000e+00> : vector<2x10xf32>
    %2 = tpu.matmul %0, %1, %cst {dimension_numbers = #tpu.dot_dimension_numbers<[1], [1], [0], [0], [0, 0, 1, 0], [], []>} : vector<2x1024xf32>, vector<10x1024xf32>, vector<2x10xf32> -> vector<2x10xf32>
    %c0_3 = arith.constant 0 : index
    %c0_4 = arith.constant 0 : index
    %3 = vector.load %arg3[%c0_3, %c0_4] : memref<1x10xf32, #tpu.memory_space<vmem>>, vector<1x10xf32>
    %4 = vector.broadcast %3 : vector<1x10xf32> to vector<2x10xf32>
    %5 = arith.addf %2, %4 : vector<2x10xf32>
    %c0_5 = arith.constant 0 : index
    %c0_6 = arith.constant 0 : index
    %6 = vector.load %arg4[%c0_5, %c0_6] : memref<2x10xf32, #tpu.memory_space<vmem>>, vector<2x10xf32>
    tpu.vector_store %arg4[%c0_5, %c0_6], %5 {strides = array<i32>} : memref<2x10xf32, #tpu.memory_space<vmem>>, vector<2x10xf32>,
    return
  }
  func.func @transform_0(%arg0: i32) -> (i32, i32) {
    %c0_i32 = arith.constant 0 : i32
    %c0_i32_0 = arith.constant 0 : i32
    return %arg0, %c0_i32 : i32, i32
  }
  func.func @transform_1(%arg0: i32) -> (i32, i32) {
    %c0_i32 = arith.constant 0 : i32
    %c0_i32_0 = arith.constant 0 : i32
    %c0_i32_1 = arith.constant 0 : i32
    return %c0_i32, %c0_i32_0 : i32, i32
  }
  func.func @transform_2(%arg0: i32) -> (i32, i32) {
    %c0_i32 = arith.constant 0 : i32
    %c0_i32_0 = arith.constant 0 : i32
    %c0_i32_1 = arith.constant 0 : i32
    return %c0_i32, %c0_i32_0 : i32, i32
  }
  func.func @transform_3(%arg0: i32) -> (i32, i32) {
    %c0_i32 = arith.constant 0 : i32
    %c0_i32_0 = arith.constant 0 : i32
    return %arg0, %c0_i32 : i32, i32
  }
}

</mosaic_0001>

<llo_original>
// kernel: tpu_custom_call.1
$region0: #{tpu_custom_call.1}
  #allocation0 [shape = 'u32[]', space=smem, size = 0x4, offset = 0x4, fixed_abs, tag = 'smem constant byte address 0x4 - core index']
  #allocation1 [shape = 'u32[144,128]{1,0:T(1,128)}', space=vmem, size = 0x12000, scoped, tag = 'internal scratch']
  %s0 = inlined_call_operand.hbm [shape: f32[2,1024], index: 0, kind: input, shape index: {}]
  %s1 = inlined_call_operand.hbm [shape: f32[10,1024], index: 1, kind: input, shape index: {}]
  %s2 = inlined_call_operand.vmem [shape: f32[1,10], index: 2, kind: input, shape index: {}]
  %s3 = inlined_call_operand.hbm [shape: f32[2,10], index: 3, kind: output, shape index: {}]
  %s4 = sld [smem:[#allocation0]]
  $region30: #{tpu_custom_call.1} parent=0
    _
  %s6 = ssub.s32 1, %s4
  %s7 = scalar_select 0, %s6, %s4
  $region1: #{tpu_custom_call.1} parent=0
    #allocation2 [shape = 'u8[8192]{0}', space=vmem, size = 0x2000, scoped, tag = 'input window, operand 0, single buffered']
    #allocation3 [shape = 's32[1]{0}', space=sflag, size = 0x4, scoped, tag = 'scoped memory for tpu_custom_call.1']
    #allocation4 [shape = 's32[1]{0}', space=sflag, size = 0x4, scoped, tag = 'scoped memory for tpu_custom_call.1']
    #allocation5 [shape = 'u8[65536]{0}', space=vmem, size = 0x10000, scoped, tag = 'input window, operand 1, single buffered']
    #allocation6 [shape = 's32[1]{0}', space=sflag, size = 0x4, scoped, tag = 'scoped memory for tpu_custom_call.1']
    #allocation7 [shape = 'u8[1024]{0}', space=vmem, size = 0x400, scoped, tag = 'output window, operand 0, single buffered']
    %8 = vsyncpa [#allocation3], 0
    %9 = vsyncpa [#allocation6], 0
    %10 = vsyncpa [#allocation4], 0
    // Predicated region
    $region2: #{tpu_custom_call.1} parent=1 // pred_check
      _
    $region3: #{tpu_custom_call.1} parent=1 // pred_check_branch
      %12 = sbr.rel (0) target = $region5
    $region4: #{tpu_custom_call.1} parent=1 // pred_region
      %s14 = ssub.s32 256, 256
      %15 = vsyncadd [#allocation3], %s14
      %s17 = sshll.u32 [#allocation2], 4
      %s18 = int_to_ptr.vmem [resolvable:$true] %s17
      %20 = dma.hbm_to_vmem [thread:$0]  %s0, 256, %s18, [#allocation3]
    $region5: #{tpu_custom_call.1} parent=1 // pred_fallthru
      _
    // Predicated region
    $region6: #{tpu_custom_call.1} parent=1 // pred_check
      _
    $region7: #{tpu_custom_call.1} parent=1 // pred_check_branch
      %22 = sbr.rel (0) target = $region9
    $region8: #{tpu_custom_call.1} parent=1 // pred_region
      %s24 = ssub.s32 2048, 2048
      %25 = vsyncadd [#allocation6], %s24
      %s26 = sshll.u32 [#allocation5], 4
      %s27 = int_to_ptr.vmem [resolvable:$true] %s26
      %32 = dma.hbm_to_vmem [thread:$0]  %s1, 2048, %s27, [#allocation6], 1024, 1024, 64
    $region9: #{tpu_custom_call.1} parent=1 // pred_fallthru
      _
    // Predicated region
    $region10: #{tpu_custom_call.1} parent=1 // pred_check
      _
    $region11: #{tpu_custom_call.1} parent=1 // pred_check_branch
      %34 = sbr.rel (0) target = $region13
    $region12: #{tpu_custom_call.1} parent=1 // pred_region
      _
    $region13: #{tpu_custom_call.1} parent=1 // pred_fallthru
      _
    // Predicated region
    $region14: #{tpu_custom_call.1} parent=1 // pred_check
      _
    $region15: #{tpu_custom_call.1} parent=1 // pred_check_branch
      %36 = sbr.rel (0) target = $region17
    $region16: #{tpu_custom_call.1} parent=1 // pred_region
      %37 = dma.done [#allocation3], 256
    $region17: #{tpu_custom_call.1} parent=1 // pred_fallthru
      _
    // Predicated region
    $region18: #{tpu_custom_call.1} parent=1 // pred_check
      _
    $region19: #{tpu_custom_call.1} parent=1 // pred_check_branch
      %39 = sbr.rel (0) target = $region21
    $region20: #{tpu_custom_call.1} parent=1 // pred_region
      %40 = dma.done [#allocation6], 2048
    $region21: #{tpu_custom_call.1} parent=1 // pred_fallthru
      _
    %v41 = vld [vmem:[#allocation2] sm:$0xff]
    %v42 = vld [vmem:[#allocation2 + $0x8] sm:$0xff]
    %v43 = vld [vmem:[#allocation5] sm:$0xff]
    %v44 = vld [vmem:[#allocation5 + $0x8] sm:$0xff]
    %v45 = vld [vmem:[#allocation5 + $0x10] sm:$0xff]
    %v46 = vld [vmem:[#allocation5 + $0x18] sm:$0xff]
    %v47 = vld [vmem:[#allocation5 + $0x20] sm:$0xff]
    %v48 = vld [vmem:[#allocation5 + $0x28] sm:$0xff]
    %v49 = vld [vmem:[#allocation5 + $0x30] sm:$0xff]
    %v50 = vld [vmem:[#allocation5 + $0x38] sm:$0xff]
    %v51 = vld [vmem:[#allocation5 + $0x40] sm:$0x3]
    %v52 = vld [vmem:[#allocation5 + $0x48] sm:$0x3]
    %v53 = vld [vmem:[#allocation5 + $0x50] sm:$0x3]
    %v54 = vld [vmem:[#allocation5 + $0x58] sm:$0x3]
    %v55 = vld [vmem:[#allocation5 + $0x60] sm:$0x3]
    %v56 = vld [vmem:[#allocation5 + $0x68] sm:$0x3]
    %v57 = vld [vmem:[#allocation5 + $0x70] sm:$0x3]
    %v58 = vld [vmem:[#allocation5 + $0x78] sm:$0x3]
    %v59 = vld [vmem:[%s2] sm:$0x1]
    %v61 = vlaneseq
    %v62 = vshrl.u32 %v61, 7
    %v63 = vsub.s32 0, %v62
    %v64 = vrot.slane %v59, %v63
    %v68 = vcombine.high %v41, %v41
    %v70 = vunpack.c.l.s4 1983009808
    %v71 = vunpack.c.0.s8 %v70
    %v72 = vlaneseq
    %v73 = vshrl.u32 %v72, 7
    %v74 = vsub.s32 %v71, %v73
    %v75 = vrot.slane %v41, %v74
    %v77 = vunpack.c.l.s4 1983009808
    %v78 = vunpack.c.0.s8 %v77
    %v79 = vlaneseq
    %v80 = vshrl.u32 %v79, 7
    %v81 = vsub.s32 %v78, %v80
    %v82 = vrot.slane %v68, %v81
    %v83 = vcombine.high %v75, %v75
    %v84 = vcombine.high %v82, %v82
    %v85 = vcombine.high %v42, %v42
    %v87 = vunpack.c.l.s4 1983009808
    %v88 = vunpack.c.0.s8 %v87
    %v89 = vlaneseq
    %v90 = vshrl.u32 %v89, 7
    %v91 = vsub.s32 %v88, %v90
    %v92 = vrot.slane %v42, %v91
    %v94 = vunpack.c.l.s4 1983009808
    %v95 = vunpack.c.0.s8 %v94
    %v96 = vlaneseq
    %v97 = vshrl.u32 %v96, 7
    %v98 = vsub.s32 %v95, %v97
    %v99 = vrot.slane %v85, %v98
    %v100 = vcombine.high %v92, %v92
    %v101 = vcombine.high %v99, %v99
    %110 = vmatprep.subr.mxu0 %v44
    %111 = vmatpush1.xpose.msra.mxu0 %v43
    %112 = vmatprep.subr.mxu0 %v52
    %113 = vmatpush1.xpose.msra.mxu0 %v51
    %114 = vmatprep.subr.mxu0 0.0
    %115 = vmatpush1.xpose.msra.mxu0 0.0
    %116 = vmatprep.subr.mxu0 0.0
    %117 = vmatpush1.xpose.msra.mxu0 0.0
    %118 = vmatprep.subr.mxu0 0.0
    %119 = vmatpush1.xpose.msra.mxu0 0.0
    %120 = vmatprep.subr.mxu0 0.0
    %121 = vmatpush1.xpose.msra.mxu0 0.0
    %122 = vmatprep.subr.mxu0 0.0
    %123 = vmatpush1.xpose.msra.mxu0 0.0
    %124 = vmatprep.subr.mxu0 0.0
    %125 = vmatpush1.xpose.msra.mxu0 0.0
    %126 = vmatprep.subr.mxu0 0.0
    %127 = vmatpush1.xpose.msra.mxu0 0.0
    %128 = vmatprep.subr.mxu0 0.0
    %129 = vmatpush1.xpose.msra.mxu0 0.0
    %130 = vmatprep.subr.mxu0 0.0
    %131 = vmatpush1.xpose.msra.mxu0 0.0
    %132 = vmatprep.subr.mxu0 0.0
    %133 = vmatpush1.xpose.msra.mxu0 0.0
    %134 = vmatprep.subr.mxu0 0.0
    %135 = vmatpush1.xpose.msra.mxu0 0.0
    %136 = vmatprep.subr.mxu0 0.0
    %137 = vmatpush1.xpose.msra.mxu0 0.0
    %138 = vmatprep.subr.mxu0 0.0
    %139 = vmatpush1.xpose.msra.mxu0 0.0
    %140 = vmatprep.subr.mxu0 0.0
    %141 = vmatpush1.xpose.msra.mxu0 0.0
    %142 = vmatprep.subr.mxu0 0.0
    %143 = vmatpush1.xpose.msra.mxu0 0.0
    %144 = vmatprep.subr.mxu0 0.0
    %145 = vmatpush1.xpose.msra.mxu0 0.0
    %146 = vmatprep.subr.mxu0 0.0
    %147 = vmatpush1.xpose.msra.mxu0 0.0
    %148 = vmatprep.subr.mxu0 0.0
    %149 = vmatpush1.xpose.msra.mxu0 0.0
    %150 = vmatprep.subr.mxu0 0.0
    %151 = vmatpush1.xpose.msra.mxu0 0.0
    %152 = vmatprep.subr.mxu0 0.0
    %153 = vmatpush1.xpose.msra.mxu0 0.0
    %154 = vmatprep.subr.mxu0 0.0
    %155 = vmatpush1.xpose.msra.mxu0 0.0
    %156 = vmatprep.subr.mxu0 0.0
    %157 = vmatpush1.xpose.msra.mxu0 0.0
    %158 = vmatprep.subr.mxu0 0.0
    %159 = vmatpush1.xpose.msra.mxu0 0.0
    %160 = vmatprep.subr.mxu0 0.0
    %161 = vmatpush1.xpose.msra.mxu0 0.0
    %162 = vmatprep.subr.mxu0 0.0
    %163 = vmatpush1.xpose.msra.mxu0 0.0
    %164 = vmatprep.subr.mxu0 0.0
    %165 = vmatpush1.xpose.msra.mxu0 0.0
    %166 = vmatprep.subr.mxu0 0.0
    %167 = vmatpush1.xpose.msra.mxu0 0.0
    %168 = vmatprep.subr.mxu0 0.0
    %169 = vmatpush1.xpose.msra.mxu0 0.0
    %170 = vmatprep.subr.mxu0 0.0
    %171 = vmatpush1.xpose.msra.mxu0 0.0
    %172 = vmatprep.subr.mxu0 0.0
    %173 = vmatpush1.xpose.msra.mxu0 0.0
    %174 = vmatprep.mubr.f32.mxu0 %v83
    %175 = vmatmul.mubr.f32.gmra.mrb[0].mxu0 %v75
    %v176 = vpop.f32.mrb[0].mxu0
    %v177 = vadd.f32 %v64, %v176
    %v178 = vpop.f32.mrb[0].mxu0
    %179 = vdwg.mxu0
    %180 = vmatprep.subr.mxu0 %v46
    %181 = vmatpush1.xpose.msra.mxu0 %v45
    %182 = vmatprep.subr.mxu0 %v54
    %183 = vmatpush1.xpose.msra.mxu0 %v53
    %184 = vmatprep.subr.mxu0 0.0
    %185 = vmatpush1.xpose.msra.mxu0 0.0
    %186 = vmatprep.subr.mxu0 0.0
    %187 = vmatpush1.xpose.msra.mxu0 0.0
    %188 = vmatprep.subr.mxu0 0.0
    %189 = vmatpush1.xpose.msra.mxu0 0.0
    %190 = vmatprep.subr.mxu0 0.0
    %191 = vmatpush1.xpose.msra.mxu0 0.0
    %192 = vmatprep.subr.mxu0 0.0
    %193 = vmatpush1.xpose.msra.mxu0 0.0
    %194 = vmatprep.subr.mxu0 0.0
    %195 = vmatpush1.xpose.msra.mxu0 0.0
    %196 = vmatprep.subr.mxu0 0.0
    %197 = vmatpush1.xpose.msra.mxu0 0.0
    %198 = vmatprep.subr.mxu0 0.0
    %199 = vmatpush1.xpose.msra.mxu0 0.0
    %200 = vmatprep.subr.mxu0 0.0
    %201 = vmatpush1.xpose.msra.mxu0 0.0
    %202 = vmatprep.subr.mxu0 0.0
    %203 = vmatpush1.xpose.msra.mxu0 0.0
    %204 = vmatprep.subr.mxu0 0.0
    %205 = vmatpush1.xpose.msra.mxu0 0.0
    %206 = vmatprep.subr.mxu0 0.0
    %207 = vmatpush1.xpose.msra.mxu0 0.0
    %208 = vmatprep.subr.mxu0 0.0
    %209 = vmatpush1.xpose.msra.mxu0 0.0
    %210 = vmatprep.subr.mxu0 0.0
    %211 = vmatpush1.xpose.msra.mxu0 0.0
    %212 = vmatprep.subr.mxu0 0.0
    %213 = vmatpush1.xpose.msra.mxu0 0.0
    %214 = vmatprep.subr.mxu0 0.0
    %215 = vmatpush1.xpose.msra.mxu0 0.0
    %216 = vmatprep.subr.mxu0 0.0
    %217 = vmatpush1.xpose.msra.mxu0 0.0
    %218 = vmatprep.subr.mxu0 0.0
    %219 = vmatpush1.xpose.msra.mxu0 0.0
    %220 = vmatprep.subr.mxu0 0.0
    %221 = vmatpush1.xpose.msra.mxu0 0.0
    %222 = vmatprep.subr.mxu0 0.0
    %223 = vmatpush1.xpose.msra.mxu0 0.0
    %224 = vmatprep.subr.mxu0 0.0
    %225 = vmatpush1.xpose.msra.mxu0 0.0
    %226 = vmatprep.subr.mxu0 0.0
    %227 = vmatpush1.xpose.msra.mxu0 0.0
    %228 = vmatprep.subr.mxu0 0.0
    %229 = vmatpush1.xpose.msra.mxu0 0.0
    %230 = vmatprep.subr.mxu0 0.0
    %231 = vmatpush1.xpose.msra.mxu0 0.0
    %232 = vmatprep.subr.mxu0 0.0
    %233 = vmatpush1.xpose.msra.mxu0 0.0
    %234 = vmatprep.subr.mxu0 0.0
    %235 = vmatpush1.xpose.msra.mxu0 0.0
    %236 = vmatprep.subr.mxu0 0.0
    %237 = vmatpush1.xpose.msra.mxu0 0.0
    %238 = vmatprep.subr.mxu0 0.0
    %239 = vmatpush1.xpose.msra.mxu0 0.0
    %240 = vmatprep.subr.mxu0 0.0
    %241 = vmatpush1.xpose.msra.mxu0 0.0
    %242 = vmatprep.subr.mxu0 0.0
    %243 = vmatpush1.xpose.msra.mxu0 0.0
    %244 = vmatprep.mubr.f32.mxu0 %v84
    %245 = vmatmul.mubr.f32.gmra.mrb[0].mxu0 %v82
    %v246 = vpop.f32.mrb[0].mxu0
    %v247 = vadd.f32 %v177, %v246
    %v248 = vpop.f32.mrb[0].mxu0
    %249 = vdwg.mxu0
    %250 = vmatprep.subr.mxu0 %v48
    %251 = vmatpush1.xpose.msra.mxu0 %v47
    %252 = vmatprep.subr.mxu0 %v56
    %253 = vmatpush1.xpose.msra.mxu0 %v55
    %254 = vmatprep.subr.mxu0 0.0
    %255 = vmatpush1.xpose.msra.mxu0 0.0
    %256 = vmatprep.subr.mxu0 0.0
    %257 = vmatpush1.xpose.msra.mxu0 0.0
    %258 = vmatprep.subr.mxu0 0.0
    %259 = vmatpush1.xpose.msra.mxu0 0.0
    %260 = vmatprep.subr.mxu0 0.0
    %261 = vmatpush1.xpose.msra.mxu0 0.0
    %262 = vmatprep.subr.mxu0 0.0
    %263 = vmatpush1.xpose.msra.mxu0 0.0
    %264 = vmatprep.subr.mxu0 0.0
    %265 = vmatpush1.xpose.msra.mxu0 0.0
    %266 = vmatprep.subr.mxu0 0.0
    %267 = vmatpush1.xpose.msra.mxu0 0.0
    %268 = vmatprep.subr.mxu0 0.0
    %269 = vmatpush1.xpose.msra.mxu0 0.0
    %270 = vmatprep.subr.mxu0 0.0
    %271 = vmatpush1.xpose.msra.mxu0 0.0
    %272 = vmatprep.subr.mxu0 0.0
    %273 = vmatpush1.xpose.msra.mxu0 0.0
    %274 = vmatprep.subr.mxu0 0.0
    %275 = vmatpush1.xpose.msra.mxu0 0.0
    %276 = vmatprep.subr.mxu0 0.0
    %277 = vmatpush1.xpose.msra.mxu0 0.0
    %278 = vmatprep.subr.mxu0 0.0
    %279 = vmatpush1.xpose.msra.mxu0 0.0
    %280 = vmatprep.subr.mxu0 0.0
    %281 = vmatpush1.xpose.msra.mxu0 0.0
    %282 = vmatprep.subr.mxu0 0.0
    %283 = vmatpush1.xpose.msra.mxu0 0.0
    %284 = vmatprep.subr.mxu0 0.0
    %285 = vmatpush1.xpose.msra.mxu0 0.0
    %286 = vmatprep.subr.mxu0 0.0
    %287 = vmatpush1.xpose.msra.mxu0 0.0
    %288 = vmatprep.subr.mxu0 0.0
    %289 = vmatpush1.xpose.msra.mxu0 0.0
    %290 = vmatprep.subr.mxu0 0.0
    %291 = vmatpush1.xpose.msra.mxu0 0.0
    %292 = vmatprep.subr.mxu0 0.0
    %293 = vmatpush1.xpose.msra.mxu0 0.0
    %294 = vmatprep.subr.mxu0 0.0
    %295 = vmatpush1.xpose.msra.mxu0 0.0
    %296 = vmatprep.subr.mxu0 0.0
    %297 = vmatpush1.xpose.msra.mxu0 0.0
    %298 = vmatprep.subr.mxu0 0.0
    %299 = vmatpush1.xpose.msra.mxu0 0.0
    %300 = vmatprep.subr.mxu0 0.0
    %301 = vmatpush1.xpose.msra.mxu0 0.0
    %302 = vmatprep.subr.mxu0 0.0
    %303 = vmatpush1.xpose.msra.mxu0 0.0
    %304 = vmatprep.subr.mxu0 0.0
    %305 = vmatpush1.xpose.msra.mxu0 0.0
    %306 = vmatprep.subr.mxu0 0.0
    %307 = vmatpush1.xpose.msra.mxu0 0.0
    %308 = vmatprep.subr.mxu0 0.0
    %309 = vmatpush1.xpose.msra.mxu0 0.0
    %310 = vmatprep.subr.mxu0 0.0
    %311 = vmatpush1.xpose.msra.mxu0 0.0
    %312 = vmatprep.subr.mxu0 0.0
    %313 = vmatpush1.xpose.msra.mxu0 0.0
    %314 = vmatprep.mubr.f32.mxu0 %v100
    %315 = vmatmul.mubr.f32.gmra.mrb[0].mxu0 %v92
    %v316 = vpop.f32.mrb[0].mxu0
    %v317 = vadd.f32 %v247, %v316
    %v318 = vpop.f32.mrb[0].mxu0
    %319 = vdwg.mxu0
    %320 = vmatprep.subr.mxu0 %v50
    %321 = vmatpush1.xpose.msra.mxu0 %v49
    %322 = vmatprep.subr.mxu0 %v58
    %323 = vmatpush1.xpose.msra.mxu0 %v57
    %324 = vmatprep.subr.mxu0 0.0
    %325 = vmatpush1.xpose.msra.mxu0 0.0
    %326 = vmatprep.subr.mxu0 0.0
    %327 = vmatpush1.xpose.msra.mxu0 0.0
    %328 = vmatprep.subr.mxu0 0.0
    %329 = vmatpush1.xpose.msra.mxu0 0.0
    %330 = vmatprep.subr.mxu0 0.0
    %331 = vmatpush1.xpose.msra.mxu0 0.0
    %332 = vmatprep.subr.mxu0 0.0
    %333 = vmatpush1.xpose.msra.mxu0 0.0
    %334 = vmatprep.subr.mxu0 0.0
    %335 = vmatpush1.xpose.msra.mxu0 0.0
    %336 = vmatprep.subr.mxu0 0.0
    %337 = vmatpush1.xpose.msra.mxu0 0.0
    %338 = vmatprep.subr.mxu0 0.0
    %339 = vmatpush1.xpose.msra.mxu0 0.0
    %340 = vmatprep.subr.mxu0 0.0
    %341 = vmatpush1.xpose.msra.mxu0 0.0
    %342 = vmatprep.subr.mxu0 0.0
    %343 = vmatpush1.xpose.msra.mxu0 0.0
    %344 = vmatprep.subr.mxu0 0.0
    %345 = vmatpush1.xpose.msra.mxu0 0.0
    %346 = vmatprep.subr.mxu0 0.0
    %347 = vmatpush1.xpose.msra.mxu0 0.0
    %348 = vmatprep.subr.mxu0 0.0
    %349 = vmatpush1.xpose.msra.mxu0 0.0
    %350 = vmatprep.subr.mxu0 0.0
    %351 = vmatpush1.xpose.msra.mxu0 0.0
    %352 = vmatprep.subr.mxu0 0.0
    %353 = vmatpush1.xpose.msra.mxu0 0.0
    %354 = vmatprep.subr.mxu0 0.0
    %355 = vmatpush1.xpose.msra.mxu0 0.0
    %356 = vmatprep.subr.mxu0 0.0
    %357 = vmatpush1.xpose.msra.mxu0 0.0
    %358 = vmatprep.subr.mxu0 0.0
    %359 = vmatpush1.xpose.msra.mxu0 0.0
    %360 = vmatprep.subr.mxu0 0.0
    %361 = vmatpush1.xpose.msra.mxu0 0.0
    %362 = vmatprep.subr.mxu0 0.0
    %363 = vmatpush1.xpose.msra.mxu0 0.0
    %364 = vmatprep.subr.mxu0 0.0
    %365 = vmatpush1.xpose.msra.mxu0 0.0
    %366 = vmatprep.subr.mxu0 0.0
    %367 = vmatpush1.xpose.msra.mxu0 0.0
    %368 = vmatprep.subr.mxu0 0.0
    %369 = vmatpush1.xpose.msra.mxu0 0.0
    %370 = vmatprep.subr.mxu0 0.0
    %371 = vmatpush1.xpose.msra.mxu0 0.0
    %372 = vmatprep.subr.mxu0 0.0
    %373 = vmatpush1.xpose.msra.mxu0 0.0
    %374 = vmatprep.subr.mxu0 0.0
    %375 = vmatpush1.xpose.msra.mxu0 0.0
    %376 = vmatprep.subr.mxu0 0.0
    %377 = vmatpush1.xpose.msra.mxu0 0.0
    %378 = vmatprep.subr.mxu0 0.0
    %379 = vmatpush1.xpose.msra.mxu0 0.0
    %380 = vmatprep.subr.mxu0 0.0
    %381 = vmatpush1.xpose.msra.mxu0 0.0
    %382 = vmatprep.subr.mxu0 0.0
    %383 = vmatpush1.xpose.msra.mxu0 0.0
    %384 = vmatprep.mubr.f32.mxu0 %v101
    %385 = vmatmul.mubr.f32.gmra.mrb[0].mxu0 %v99
    %v386 = vpop.f32.mrb[0].mxu0
    %v387 = vadd.f32 %v317, %v386
    %v388 = vpop.f32.mrb[0].mxu0
    %389 = vdwg.mxu0
    %vm390 = vcmask 74752
    %391 = vst.msk [vmem:[#allocation7] sm:$0x3] %vm390, %v387
    // Predicated region
    $region22: #{tpu_custom_call.1} parent=1 // pred_check
      _
    $region23: #{tpu_custom_call.1} parent=1 // pred_check_branch
      %393 = sbr.rel (0) target = $region25
    $region24: #{tpu_custom_call.1} parent=1 // pred_region
      %s395 = ssub.s32 32, 32
      %396 = vsyncadd [#allocation4], %s395
      %s398 = sshll.u32 [#allocation7], 4
      %s399 = int_to_ptr.vmem [resolvable:$true] %s398
      %401 = dma.vmem_to_hbm [thread:$0]  %s399, 32, %s3, [#allocation4]
    $region25: #{tpu_custom_call.1} parent=1 // pred_fallthru
      _
    // Predicated region
    $region26: #{tpu_custom_call.1} parent=1 // pred_check
      _
    $region27: #{tpu_custom_call.1} parent=1 // pred_check_branch
      %403 = sbr.rel (0) target = $region29
    $region28: #{tpu_custom_call.1} parent=1 // pred_region
      %404 = dma.done [#allocation4], 32
    $region29: #{tpu_custom_call.1} parent=1 // pred_fallthru
      _
    %405 = vsyncpa [#allocation3], 1
    %406 = vsyncpa [#allocation6], 1
    %407 = vsyncpa [#allocation4], 1

</llo_original>
